<compile_context>
chip_gen: v7x
topology: tpu7x:2x2x1
jax: 0.10.0
libtpu: 0.0.40
codegen_flags: <defaults>
</compile_context>

<pallas_src>
import functools

import jax
import jax.numpy as jnp
from jax import lax
from jax.experimental import pallas as pl
from jax.experimental.pallas import tpu as pltpu

_BN_EPS = 1e-3  # ultralytics BatchNorm2d eps


def _round8(v):
    return ((int(v) + 7) // 8) * 8


def _scdown_kernel(xm_ref, xh_ref, wdw_ref, wpw_ref, bias_ref, out_ref,
                   *, k, s, wup, high_precision):
    """One (batch, output-row-tile) grid step.

    xm_ref  : (tho, s*s, Wc8, C1)  phase-split padded input rows of this tile
    xh_ref  : (1,   s*s, Wc8, C1)  one extra phase-row (halo for the last row)
    wdw_ref : (k*k, 1, C1)         depthwise weights with BN1 scale folded in
    wpw_ref : (C1, C2)             1x1 conv weights with BN2 scale folded in
    bias_ref: (1, C2)              fully folded bias (f32)
    out_ref : (tho, Wo, C2)        NHWC output tile
    """
    tho, wo_blk, _ = out_ref.shape
    f32 = jnp.float32

    wdw = wdw_ref[...]                                   # (k*k, 1, C1)

    def load_slab(oh, phase_idx):
        # Rows [oh, oh + tho) of the given (row-phase, col-phase) plane.
        if oh == 0:
            return xm_ref[0:tho, phase_idx]               # (tho, Wc8, C1)
        parts = []
        if tho - oh > 0:
            parts.append(xm_ref[oh:tho, phase_idx])       # (tho-oh, Wc8, C1)
        parts.append(xh_ref[0:oh, phase_idx])             # (oh,     Wc8, C1)
        return parts[0] if len(parts) == 1 else jnp.concatenate(parts, axis=0)

    # --- cv1: depthwise strided conv as k per-row partial accumulators ------
    # Products + within-row adds in the compute dtype (bf16 on v6e/v7x);
    # only the final k-way adds are f32.  <= ~5 live full-size temporaries.
    acc = None
    for dh in range(k):
        ph, oh = dh % s, dh // s
        slabs = {}
        grp = None
        for dw in range(k):
            pw, ow = dw % s, dw // s
            if pw not in slabs:
                slabs[pw] = load_slab(oh, ph * s + pw)    # aligned full-width load
            tap = slabs[pw][:, ow:ow + wup, :]            # aligned when ow == 0
            prod = tap * wdw[dh * k + dw]
            grp = prod if grp is None else grp + prod
        grp = grp.astype(f32)
        acc = grp if acc is None else acc + grp           # (tho, wup, C1) f32

    # --- cv2: 1x1 conv on the MXU (BN2 folded), then bias + SiLU ------------
    a2 = acc.reshape(tho * wup, acc.shape[-1])            # wup % 8 == 0 -> free
    if high_precision:
        y = jnp.dot(a2, wpw_ref[...], preferred_element_type=f32)
    else:
        y = jnp.dot(a2.astype(wpw_ref.dtype), wpw_ref[...],
                    preferred_element_type=f32)
    y = y + bias_ref[...]
    y = y * jax.nn.sigmoid(y)                             # SiLU
    y = y.reshape(tho, wup, y.shape[-1])
    out_ref[...] = y[:, :wo_blk, :].astype(out_ref.dtype)


def _vmem_caps():
    """(physical VMEM bytes, vmem_limit_bytes to request)."""
    cap = 64 * 1024 * 1024
    try:
        cap = int(pltpu.get_tpu_info().vmem_capacity_bytes)
    except Exception:
        pass
    limit = max(32 * 1024 * 1024,
                min((cap * 3) // 4, cap - 16 * 1024 * 1024))
    return cap, int(limit)


def _pick_row_tile(N, Ho, Wo, wup, Wc8, C1, C2, k, s,
                   in_isz, out_isz, ws_budget, m_cap):
    """Largest divisor of Ho whose full working set fits the VMEM budget."""
    def ws_bytes(tho):
        xmain = 2 * tho * s * s * Wc8 * C1 * in_isz       # double buffered
        xhalo = 2 * 1 * s * s * Wc8 * C1 * in_isz
        outb = 2 * tho * Wo * C2 * out_isz
        f32t = 5 * tho * wup * C1 * 4                     # acc / group / slabs
        mm = tho * wup * (C1 * 2 + C2 * 6)                # bf16 operand + f32 y
        wgt = (k * k * C1 + C1 * C2 + C2) * 4
        return xmain + xhalo + outb + f32t + mm + wgt

    divs = [d for d in range(1, Ho + 1) if Ho % d == 0]
    ok = [d for d in divs if d * wup <= m_cap and ws_bytes(d) <= ws_budget]
    tho = max(ok) if ok else 1
    if N * (Ho // tho) < 2:                               # keep 2 TCs busy (v7x)
        smaller = [d for d in ok if d < Ho]
        if smaller:
            tho = max(smaller)
    return tho


def scdown_forward(x, params, k, s, *, compute_dtype=None,
                   high_precision=False, out_layout="NHWC"):
    """x: (N, C1, H, W) NCHW like PyTorch.  Returns NHWC (default) or NCHW."""
    if k > 2 * s:
        # TODO(synk): general halo (k > 2*s) needs a deeper halo block.
        raise NotImplementedError("SCDown Pallas kernel supports k <= 2*s")

    N, C1, H, W = x.shape
    C2 = params["w_pw"].shape[0]
    p = k // 2                                            # Conv autopad
    Ho = (H + 2 * p - k) // s + 1
    Wo = (W + 2 * p - k) // s + 1

    cdtype = (jnp.dtype(compute_dtype) if compute_dtype is not None
              else jnp.dtype(x.dtype))
    out_dtype = x.dtype
    mxu_dtype = jnp.float32 if high_precision else jnp.bfloat16

    # ---- fold eval-mode BN into weights / one bias (fold in f32, cast last) --
    f32 = jnp.float32
    sc1 = (params["gamma1"].astype(f32) /
           jnp.sqrt(params["var1"].astype(f32) + _BN_EPS))
    bi1 = params["beta1"].astype(f32) - params["mean1"].astype(f32) * sc1
    sc2 = (params["gamma2"].astype(f32) /
           jnp.sqrt(params["var2"].astype(f32) + _BN_EPS))
    bi2 = params["beta2"].astype(f32) - params["mean2"].astype(f32) * sc2

    wdw = jnp.transpose(params["w_dw"][:, 0].astype(f32) * sc1[:, None, None],
                        (1, 2, 0))                        # (k, k, C1)
    wdw = wdw.reshape(k * k, 1, C1).astype(cdtype)
    w2f = jnp.transpose(params["w_pw"][:, :, 0, 0].astype(f32), (1, 0)) \
        * sc2[None, :]                                    # (C1, C2)
    w2 = w2f.astype(mxu_dtype)
    bias = (bi1 @ w2f + bi2).reshape(1, C2).astype(f32)

    # ---- geometry: phase-split widths padded to sublane multiples ----------
    wup = _round8(max(Wo, 1))                             # matmul M width
    max_ow = (k - 1) // s
    Wc8 = _round8(wup + max_ow)                           # per-phase columns
    Hc = Ho + 1                                           # +1 halo phase-row
    Hp, Wp = Hc * s, Wc8 * s

    # ---- VMEM-aware row tile (tho | Ho -> exact output, no crop) -----------
    cap, vmem_limit = _vmem_caps()
    m_cap = 2048 if cap <= 64 * 1024 * 1024 else 4096
    tho = _pick_row_tile(N, Ho, Wo, wup, Wc8, C1, C2, k, s,
                         cdtype.itemsize, jnp.dtype(out_dtype).itemsize,
                         ws_budget=(vmem_limit * 3) // 5, m_cap=m_cap)
    T = Ho // tho

    # ---- single layout pass: pad NCHW, phase-split H and W by the stride ---
    # x6[n, hc, ph*s+pw, cw, c] = x_padded[n, c, hc*s+ph, cw*s+pw]
    xc = x.astype(cdtype)
    pad_b = max(0, Hp - (H + p))
    pad_r = max(0, Wp - (W + p))
    xp = jnp.pad(xc, ((0, 0), (0, 0), (p, pad_b), (p, pad_r)))[:, :, :Hp, :Wp]
    x6 = xp.reshape(N, C1, Hc, s, Wc8, s)
    x6 = jnp.transpose(x6, (0, 2, 3, 5, 4, 1)).reshape(N, Hc, s * s, Wc8, C1)

    kernel = functools.partial(_scdown_kernel, k=k, s=s, wup=wup,
                               high_precision=high_precision)
    out = pl.pallas_call(
        kernel,
        out_shape=jax.ShapeDtypeStruct((N, Ho, Wo, C2), out_dtype),
        grid_spec=pltpu.PrefetchScalarGridSpec(
            num_scalar_prefetch=0,
            grid=(N, T),
            in_specs=[
                # main tile: tho phase-rows, all s*s phases, full width
                pl.BlockSpec((None, tho, s * s, Wc8, C1),
                             lambda n, t: (n, t, 0, 0, 0)),
                # halo: the single phase-row just past this tile
                pl.BlockSpec((None, 1, s * s, Wc8, C1),
                             lambda n, t: (n, (t + 1) * tho, 0, 0, 0)),
                pl.BlockSpec((k * k, 1, C1), lambda n, t: (0, 0, 0)),
                pl.BlockSpec((C1, C2), lambda n, t: (0, 0)),
                pl.BlockSpec((1, C2), lambda n, t: (0, 0)),
            ],
            out_specs=pl.BlockSpec((None, tho, Wo, C2),
                                   lambda n, t: (n, t, 0, 0)),
        ),
        compiler_params=pltpu.CompilerParams(
            dimension_semantics=("parallel", "parallel"),
            vmem_limit_bytes=int(vmem_limit),
        ),
    )(x6, x6, wdw, w2, bias)

    if out_layout == "NCHW":                              # parity convenience
        out = jnp.transpose(out, (0, 3, 1, 2))
    return out


def scdown_reference(x, params, k, s):
    """Pure-JAX reference (lax conv) mirroring the PyTorch eval-mode forward."""
    p = k // 2
    C1 = x.shape[1]
    y = lax.conv_general_dilated(
        x, params["w_dw"], (s, s), ((p, p), (p, p)),
        dimension_numbers=("NCHW", "OIHW", "NCHW"),
        feature_group_count=C1, precision=lax.Precision.HIGHEST)
    sc1 = params["gamma1"] / jnp.sqrt(params["var1"] + _BN_EPS)
    bi1 = params["beta1"] - params["mean1"] * sc1
    y = y * sc1[None, :, None, None] + bi1[None, :, None, None]
    y = lax.conv_general_dilated(
        y, params["w_pw"], (1, 1), ((0, 0), (0, 0)),
        dimension_numbers=("NCHW", "OIHW", "NCHW"),
        precision=lax.Precision.HIGHEST)
    sc2 = params["gamma2"] / jnp.sqrt(params["var2"] + _BN_EPS)
    bi2 = params["beta2"] - params["mean2"] * sc2
    y = y * sc2[None, :, None, None] + bi2[None, :, None, None]
    return y * jax.nn.sigmoid(y)


if __name__ == "__main__":
    c1, c2, k, s = 4, 8, 3, 2
    N, H, W = 2, 16, 16

    key = jax.random.PRNGKey(0)
    ks = jax.random.split(key, 11)
    params = {
        "w_dw":   jax.random.normal(ks[0], (c1, 1, k, k), jnp.float32) * 0.2,
        "gamma1": jax.random.uniform(ks[1], (c1,), jnp.float32, 0.5, 1.5),
        "beta1":  jax.random.normal(ks[2], (c1,), jnp.float32) * 0.1,
        "mean1":  jax.random.normal(ks[3], (c1,), jnp.float32) * 0.1,
        "var1":   jax.random.uniform(ks[4], (c1,), jnp.float32, 0.5, 1.5),
        "w_pw":   jax.random.normal(ks[5], (c2, c1, 1, 1), jnp.float32) * 0.2,
        "gamma2": jax.random.uniform(ks[6], (c2,), jnp.float32, 0.5, 1.5),
        "beta2":  jax.random.normal(ks[7], (c2,), jnp.float32) * 0.1,
        "mean2":  jax.random.normal(ks[8], (c2,), jnp.float32) * 0.1,
        "var2":   jax.random.uniform(ks[9], (c2,), jnp.float32, 0.5, 1.5),
    }
    x = jax.random.normal(ks[10], (N, c1, H, W), jnp.float32)

    ref = jax.block_until_ready(scdown_reference(x, params, k, s))   # NCHW
    ref_nhwc = jnp.transpose(ref, (0, 2, 3, 1))

    # f32 compute + f32 MXU operands: tight check against the conv reference.
    # (Tolerance allows for MXU matmul pass decomposition on f32 operands.)
    fwd_hi = jax.jit(lambda x_, p_: scdown_forward(
        x_, p_, k, s, compute_dtype=jnp.float32, high_precision=True))
    out = jax.block_until_ready(fwd_hi(x, params))                   # NHWC
    assert out.shape == (N, H // s, W // s, c2), out.shape
    assert jnp.allclose(out, ref_nhwc, rtol=2e-2, atol=2e-2), \
        float(jnp.max(jnp.abs(out - ref_nhwc)))

    # bf16 storage / bf16 tap MACs / bf16 MXU operands (f32 accumulation).
    fwd_bf16 = jax.jit(lambda x_, p_: scdown_forward(
        x_, p_, k, s, compute_dtype=jnp.bfloat16))
    out_bf = jax.block_until_ready(fwd_bf16(x, params))
    assert out_bf.shape == ref_nhwc.shape
    err_bf = float(jnp.max(jnp.abs(out_bf.astype(jnp.float32) - ref_nhwc)))
    assert err_bf < 0.25, err_bf

    # NCHW convenience layout (PyTorch module parity).
    fwd_nchw = jax.jit(lambda x_, p_: scdown_forward(
        x_, p_, k, s, compute_dtype=jnp.float32, high_precision=True,
        out_layout="NCHW"))
    out_nchw = jax.block_until_ready(fwd_nchw(x, params))
    assert out_nchw.shape == ref.shape
    assert jnp.allclose(out_nchw, jnp.transpose(out, (0, 3, 1, 2)),
                        rtol=1e-5, atol=1e-5)

    print("KERNEL_OK")
</pallas_src>

<mosaic_0001>
module attributes {stable_mosaic.version = 11 : i64} {
  func.func @_scdown_kernel(%arg0: i32, %arg1: i32, %arg2: memref<1x8x4x16x4xf32, #tpu.memory_space<vmem>>, %arg3: memref<1x1x4x16x4xf32, #tpu.memory_space<vmem>>, %arg4: memref<9x1x4xf32, #tpu.memory_space<vmem>>, %arg5: memref<4x8xf32, #tpu.memory_space<vmem>>, %arg6: memref<1x8xf32, #tpu.memory_space<vmem>>, %arg7: memref<1x8x8x8xf32, #tpu.memory_space<vmem>>) attributes {dimension_semantics = [#tpu.dimension_semantics<parallel>, #tpu.dimension_semantics<parallel>], iteration_bounds = array<i64: 2, 1>, scalar_prefetch = 0 : i64, scratch_operands = 0 : i64, tpu.core_type = #tpu.core_type<tc>, window_params = [{transform_indices = @transform_0, window_bounds = array<i64: 1, 8, 4, 16, 4>}, {transform_indices = @transform_1, window_bounds = array<i64: 1, 1, 4, 16, 4>}, {pipeline_mode = #tpu.pipeline_mode<synchronous>, transform_indices = @transform_2, window_bounds = array<i64: 9, 1, 4>}, {pipeline_mode = #tpu.pipeline_mode<synchronous>, transform_indices = @transform_3, window_bounds = array<i64: 4, 8>}, {pipeline_mode = #tpu.pipeline_mode<synchronous>, transform_indices = @transform_4, window_bounds = array<i64: 1, 8>}, {transform_indices = @transform_5, window_bounds = array<i64: 1, 8, 8, 8>}]} {
    %c0 = arith.constant 0 : index
    %c0_0 = arith.constant 0 : index
    %c0_1 = arith.constant 0 : index
    %0 = vector.load %arg4[%c0, %c0_0, %c0_1] : memref<9x1x4xf32, #tpu.memory_space<vmem>>, vector<9x1x4xf32>
    %c0_2 = arith.constant 0 : index
    %c0_3 = arith.constant 0 : index
    %c0_4 = arith.constant 0 : index
    %c0_5 = arith.constant 0 : index
    %c0_6 = arith.constant 0 : index
    %1 = vector.load %arg2[%c0_2, %c0_3, %c0_4, %c0_5, %c0_6] : memref<1x8x4x16x4xf32, #tpu.memory_space<vmem>>, vector<1x8x1x16x4xf32>
    %2 = vector.shape_cast %1 : vector<1x8x1x16x4xf32> to vector<8x16x4xf32>
    %3 = vector.extract_strided_slice %2 {offsets = [0, 0, 0], sizes = [8, 8, 4], strides = [1, 1, 1]} : vector<8x16x4xf32> to vector<8x8x4xf32>
    %4 = vector.extract_strided_slice %0 {offsets = [0, 0, 0], sizes = [1, 1, 4], strides = [1, 1, 1]} : vector<9x1x4xf32> to vector<1x1x4xf32>
    %5 = vector.shape_cast %4 : vector<1x1x4xf32> to vector<1x4xf32>
    %6 = vector.shape_cast %5 : vector<1x4xf32> to vector<1x1x4xf32>
    %7 = vector.broadcast %6 : vector<1x1x4xf32> to vector<8x8x4xf32>
    %8 = arith.mulf %3, %7 : vector<8x8x4xf32>
    %c0_7 = arith.constant 0 : index
    %c0_8 = arith.constant 0 : index
    %c1 = arith.constant 1 : index
    %c0_9 = arith.constant 0 : index
    %c0_10 = arith.constant 0 : index
    %9 = vector.load %arg2[%c0_7, %c0_8, %c1, %c0_9, %c0_10] : memref<1x8x4x16x4xf32, #tpu.memory_space<vmem>>, vector<1x8x1x16x4xf32>
    %10 = vector.shape_cast %9 : vector<1x8x1x16x4xf32> to vector<8x16x4xf32>
    %11 = vector.extract_strided_slice %10 {offsets = [0, 0, 0], sizes = [8, 8, 4], strides = [1, 1, 1]} : vector<8x16x4xf32> to vector<8x8x4xf32>
    %12 = vector.extract_strided_slice %0 {offsets = [1, 0, 0], sizes = [1, 1, 4], strides = [1, 1, 1]} : vector<9x1x4xf32> to vector<1x1x4xf32>
    %13 = vector.shape_cast %12 : vector<1x1x4xf32> to vector<1x4xf32>
    %14 = vector.shape_cast %13 : vector<1x4xf32> to vector<1x1x4xf32>
    %15 = vector.broadcast %14 : vector<1x1x4xf32> to vector<8x8x4xf32>
    %16 = arith.mulf %11, %15 : vector<8x8x4xf32>
    %17 = arith.addf %8, %16 : vector<8x8x4xf32>
    %18 = vector.extract_strided_slice %2 {offsets = [0, 1, 0], sizes = [8, 8, 4], strides = [1, 1, 1]} : vector<8x16x4xf32> to vector<8x8x4xf32>
    %19 = vector.extract_strided_slice %0 {offsets = [2, 0, 0], sizes = [1, 1, 4], strides = [1, 1, 1]} : vector<9x1x4xf32> to vector<1x1x4xf32>
    %20 = vector.shape_cast %19 : vector<1x1x4xf32> to vector<1x4xf32>
    %21 = vector.shape_cast %20 : vector<1x4xf32> to vector<1x1x4xf32>
    %22 = vector.broadcast %21 : vector<1x1x4xf32> to vector<8x8x4xf32>
    %23 = arith.mulf %18, %22 : vector<8x8x4xf32>
    %24 = arith.addf %17, %23 : vector<8x8x4xf32>
    %c0_11 = arith.constant 0 : index
    %c0_12 = arith.constant 0 : index
    %c2 = arith.constant 2 : index
    %c0_13 = arith.constant 0 : index
    %c0_14 = arith.constant 0 : index
    %25 = vector.load %arg2[%c0_11, %c0_12, %c2, %c0_13, %c0_14] : memref<1x8x4x16x4xf32, #tpu.memory_space<vmem>>, vector<1x8x1x16x4xf32>
    %26 = vector.shape_cast %25 : vector<1x8x1x16x4xf32> to vector<8x16x4xf32>
    %27 = vector.extract_strided_slice %26 {offsets = [0, 0, 0], sizes = [8, 8, 4], strides = [1, 1, 1]} : vector<8x16x4xf32> to vector<8x8x4xf32>
    %28 = vector.extract_strided_slice %0 {offsets = [3, 0, 0], sizes = [1, 1, 4], strides = [1, 1, 1]} : vector<9x1x4xf32> to vector<1x1x4xf32>
    %29 = vector.shape_cast %28 : vector<1x1x4xf32> to vector<1x4xf32>
    %30 = vector.shape_cast %29 : vector<1x4xf32> to vector<1x1x4xf32>
    %31 = vector.broadcast %30 : vector<1x1x4xf32> to vector<8x8x4xf32>
    %32 = arith.mulf %27, %31 : vector<8x8x4xf32>
    %c0_15 = arith.constant 0 : index
    %c0_16 = arith.constant 0 : index
    %c3 = arith.constant 3 : index
    %c0_17 = arith.constant 0 : index
    %c0_18 = arith.constant 0 : index
    %33 = vector.load %arg2[%c0_15, %c0_16, %c3, %c0_17, %c0_18] : memref<1x8x4x16x4xf32, #tpu.memory_space<vmem>>, vector<1x8x1x16x4xf32>
    %34 = vector.shape_cast %33 : vector<1x8x1x16x4xf32> to vector<8x16x4xf32>
    %35 = vector.extract_strided_slice %34 {offsets = [0, 0, 0], sizes = [8, 8, 4], strides = [1, 1, 1]} : vector<8x16x4xf32> to vector<8x8x4xf32>
    %36 = vector.extract_strided_slice %0 {offsets = [4, 0, 0], sizes = [1, 1, 4], strides = [1, 1, 1]} : vector<9x1x4xf32> to vector<1x1x4xf32>
    %37 = vector.shape_cast %36 : vector<1x1x4xf32> to vector<1x4xf32>
    %38 = vector.shape_cast %37 : vector<1x4xf32> to vector<1x1x4xf32>
    %39 = vector.broadcast %38 : vector<1x1x4xf32> to vector<8x8x4xf32>
    %40 = arith.mulf %35, %39 : vector<8x8x4xf32>
    %41 = arith.addf %32, %40 : vector<8x8x4xf32>
    %42 = vector.extract_strided_slice %26 {offsets = [0, 1, 0], sizes = [8, 8, 4], strides = [1, 1, 1]} : vector<8x16x4xf32> to vector<8x8x4xf32>
    %43 = vector.extract_strided_slice %0 {offsets = [5, 0, 0], sizes = [1, 1, 4], strides = [1, 1, 1]} : vector<9x1x4xf32> to vector<1x1x4xf32>
    %44 = vector.shape_cast %43 : vector<1x1x4xf32> to vector<1x4xf32>
    %45 = vector.shape_cast %44 : vector<1x4xf32> to vector<1x1x4xf32>
    %46 = vector.broadcast %45 : vector<1x1x4xf32> to vector<8x8x4xf32>
    %47 = arith.mulf %42, %46 : vector<8x8x4xf32>
    %48 = arith.addf %41, %47 : vector<8x8x4xf32>
    %49 = arith.addf %24, %48 : vector<8x8x4xf32>
    %c0_19 = arith.constant 0 : index
    %c1_20 = arith.constant 1 : index
    %c0_21 = arith.constant 0 : index
    %c0_22 = arith.constant 0 : index
    %c0_23 = arith.constant 0 : index
    %50 = vector.load %arg2[%c0_19, %c1_20, %c0_21, %c0_22, %c0_23] : memref<1x8x4x16x4xf32, #tpu.memory_space<vmem>>, vector<1x7x1x16x4xf32>
    %51 = vector.shape_cast %50 : vector<1x7x1x16x4xf32> to vector<7x16x4xf32>
    %c0_24 = arith.constant 0 : index
    %c0_25 = arith.constant 0 : index
    %c0_26 = arith.constant 0 : index
    %c0_27 = arith.constant 0 : index
    %c0_28 = arith.constant 0 : index
    %52 = vector.load %arg3[%c0_24, %c0_25, %c0_26, %c0_27, %c0_28] : memref<1x1x4x16x4xf32, #tpu.memory_space<vmem>>, vector<1x1x1x16x4xf32>
    %53 = vector.shape_cast %52 : vector<1x1x1x16x4xf32> to vector<1x16x4xf32>
    %54 = tpu.concatenate %51, %53 in 0 : vector<7x16x4xf32>, vector<1x16x4xf32> -> vector<8x16x4xf32>
    %55 = vector.extract_strided_slice %54 {offsets = [0, 0, 0], sizes = [8, 8, 4], strides = [1, 1, 1]} : vector<8x16x4xf32> to vector<8x8x4xf32>
    %56 = vector.extract_strided_slice %0 {offsets = [6, 0, 0], sizes = [1, 1, 4], strides = [1, 1, 1]} : vector<9x1x4xf32> to vector<1x1x4xf32>
    %57 = vector.shape_cast %56 : vector<1x1x4xf32> to vector<1x4xf32>
    %58 = vector.shape_cast %57 : vector<1x4xf32> to vector<1x1x4xf32>
    %59 = vector.broadcast %58 : vector<1x1x4xf32> to vector<8x8x4xf32>
    %60 = arith.mulf %55, %59 : vector<8x8x4xf32>
    %c0_29 = arith.constant 0 : index
    %c1_30 = arith.constant 1 : index
    %c1_31 = arith.constant 1 : index
    %c0_32 = arith.constant 0 : index
    %c0_33 = arith.constant 0 : index
    %61 = vector.load %arg2[%c0_29, %c1_30, %c1_31, %c0_32, %c0_33] : memref<1x8x4x16x4xf32, #tpu.memory_space<vmem>>, vector<1x7x1x16x4xf32>
    %62 = vector.shape_cast %61 : vector<1x7x1x16x4xf32> to vector<7x16x4xf32>
    %c0_34 = arith.constant 0 : index
    %c0_35 = arith.constant 0 : index
    %c1_36 = arith.constant 1 : index
    %c0_37 = arith.constant 0 : index
    %c0_38 = arith.constant 0 : index
    %63 = vector.load %arg3[%c0_34, %c0_35, %c1_36, %c0_37, %c0_38] : memref<1x1x4x16x4xf32, #tpu.memory_space<vmem>>, vector<1x1x1x16x4xf32>
    %64 = vector.shape_cast %63 : vector<1x1x1x16x4xf32> to vector<1x16x4xf32>
    %65 = tpu.concatenate %62, %64 in 0 : vector<7x16x4xf32>, vector<1x16x4xf32> -> vector<8x16x4xf32>
    %66 = vector.extract_strided_slice %65 {offsets = [0, 0, 0], sizes = [8, 8, 4], strides = [1, 1, 1]} : vector<8x16x4xf32> to vector<8x8x4xf32>
    %67 = vector.extract_strided_slice %0 {offsets = [7, 0, 0], sizes = [1, 1, 4], strides = [1, 1, 1]} : vector<9x1x4xf32> to vector<1x1x4xf32>
    %68 = vector.shape_cast %67 : vector<1x1x4xf32> to vector<1x4xf32>
    %69 = vector.shape_cast %68 : vector<1x4xf32> to vector<1x1x4xf32>
    %70 = vector.broadcast %69 : vector<1x1x4xf32> to vector<8x8x4xf32>
    %71 = arith.mulf %66, %70 : vector<8x8x4xf32>
    %72 = arith.addf %60, %71 : vector<8x8x4xf32>
    %73 = vector.extract_strided_slice %54 {offsets = [0, 1, 0], sizes = [8, 8, 4], strides = [1, 1, 1]} : vector<8x16x4xf32> to vector<8x8x4xf32>
    %74 = vector.extract_strided_slice %0 {offsets = [8, 0, 0], sizes = [1, 1, 4], strides = [1, 1, 1]} : vector<9x1x4xf32> to vector<1x1x4xf32>
    %75 = vector.shape_cast %74 : vector<1x1x4xf32> to vector<1x4xf32>
    %76 = vector.shape_cast %75 : vector<1x4xf32> to vector<1x1x4xf32>
    %77 = vector.broadcast %76 : vector<1x1x4xf32> to vector<8x8x4xf32>
    %78 = arith.mulf %73, %77 : vector<8x8x4xf32>
    %79 = arith.addf %72, %78 : vector<8x8x4xf32>
    %80 = arith.addf %49, %79 : vector<8x8x4xf32>
    %81 = vector.shape_cast %80 : vector<8x8x4xf32> to vector<64x4xf32>
    %c0_39 = arith.constant 0 : index
    %c0_40 = arith.constant 0 : index
    %82 = vector.load %arg5[%c0_39, %c0_40] : memref<4x8xf32, #tpu.memory_space<vmem>>, vector<4x8xf32>
    %cst = arith.constant dense<0.000000e+00> : vector<64x8xf32>
    %83 = tpu.matmul %81, %82, %cst {dimension_numbers = #tpu.dot_dimension_numbers<[1], [0], [0], [1], [0, 0, 1, 1], [], []>} : vector<64x4xf32>, vector<4x8xf32>, vector<64x8xf32> -> vector<64x8xf32>
    %c0_41 = arith.constant 0 : index
    %c0_42 = arith.constant 0 : index
    %84 = vector.load %arg6[%c0_41, %c0_42] : memref<1x8xf32, #tpu.memory_space<vmem>>, vector<1x8xf32>
    %85 = vector.broadcast %84 : vector<1x8xf32> to vector<64x8xf32>
    %86 = arith.addf %83, %85 : vector<64x8xf32>
    %87 = arith.negf %86 : vector<64x8xf32>
    %88 = math.exp %87 : vector<64x8xf32>
    %cst_43 = arith.constant 1.000000e+00 : f32
    %89 = vector.broadcast %cst_43 : f32 to vector<64x8xf32>
    %90 = arith.addf %89, %88 : vector<64x8xf32>
    %91 = arith.divf %89, %90 : vector<64x8xf32>
    %92 = arith.mulf %86, %91 : vector<64x8xf32>
    %93 = vector.shape_cast %92 : vector<64x8xf32> to vector<8x8x8xf32>
    %c0_44 = arith.constant 0 : index
    %c0_45 = arith.constant 0 : index
    %c0_46 = arith.constant 0 : index
    %c0_47 = arith.constant 0 : index
    %94 = vector.load %arg7[%c0_44, %c0_45, %c0_46, %c0_47] : memref<1x8x8x8xf32, #tpu.memory_space<vmem>>, vector<1x8x8x8xf32>
    %95 = vector.shape_cast %94 : vector<1x8x8x8xf32> to vector<8x8x8xf32>
    %96 = vector.shape_cast %93 : vector<8x8x8xf32> to vector<1x8x8x8xf32>
    tpu.vector_store %arg7[%c0_44, %c0_45, %c0_46, %c0_47], %96 {strides = array<i32>} : memref<1x8x8x8xf32, #tpu.memory_space<vmem>>, vector<1x8x8x8xf32>,
    return
  }
  func.func @transform_0(%arg0: i32, %arg1: i32) -> (i32, i32, i32, i32, i32) {
    %c0_i32 = arith.constant 0 : i32
    %c0_i32_0 = arith.constant 0 : i32
    %c0_i32_1 = arith.constant 0 : i32
    %c0_i32_2 = arith.constant 0 : i32
    return %arg0, %arg1, %c0_i32, %c0_i32_0, %c0_i32_1 : i32, i32, i32, i32, i32
  }
  func.func @transform_1(%arg0: i32, %arg1: i32) -> (i32, i32, i32, i32, i32) {
    %c1_i32 = arith.constant 1 : i32
    %0 = arith.addi %arg1, %c1_i32 : i32
    %c8_i32 = arith.constant 8 : i32
    %1 = arith.muli %0, %c8_i32 : i32
    %c0_i32 = arith.constant 0 : i32
    %c0_i32_0 = arith.constant 0 : i32
    %c0_i32_1 = arith.constant 0 : i32
    %c0_i32_2 = arith.constant 0 : i32
    return %arg0, %1, %c0_i32, %c0_i32_0, %c0_i32_1 : i32, i32, i32, i32, i32
  }
  func.func @transform_2(%arg0: i32, %arg1: i32) -> (i32, i32, i32) {
    %c0_i32 = arith.constant 0 : i32
    %c0_i32_0 = arith.constant 0 : i32
    %c0_i32_1 = arith.constant 0 : i32
    %c0_i32_2 = arith.constant 0 : i32
    return %c0_i32, %c0_i32_0, %c0_i32_1 : i32, i32, i32
  }
  func.func @transform_3(%arg0: i32, %arg1: i32) -> (i32, i32) {
    %c0_i32 = arith.constant 0 : i32
    %c0_i32_0 = arith.constant 0 : i32
    %c0_i32_1 = arith.constant 0 : i32
    return %c0_i32, %c0_i32_0 : i32, i32
  }
  func.func @transform_4(%arg0: i32, %arg1: i32) -> (i32, i32) {
    %c0_i32 = arith.constant 0 : i32
    %c0_i32_0 = arith.constant 0 : i32
    %c0_i32_1 = arith.constant 0 : i32
    return %c0_i32, %c0_i32_0 : i32, i32
  }
  func.func @transform_5(%arg0: i32, %arg1: i32) -> (i32, i32, i32, i32) {
    %c0_i32 = arith.constant 0 : i32
    %c0_i32_0 = arith.constant 0 : i32
    %c0_i32_1 = arith.constant 0 : i32
    return %arg0, %arg1, %c0_i32, %c0_i32_0 : i32, i32, i32, i32
  }
}

</mosaic_0001>

<llo_original>
// kernel: _lambda_.1
$region0: #{_lambda_.1}
  #allocation0 [shape = 'u32[]', space=smem, size = 0x4, offset = 0x4, fixed_abs, tag = 'smem constant byte address 0x4 - core index']
  #allocation1 [shape = 'u32[144,128]{1,0:T(1,128)}', space=vmem, size = 0x12000, scoped, tag = 'internal scratch']
  %s0 = inlined_call_operand.vmem [shape: f32[2,9,4,16,4], index: 0, kind: input, shape index: {}, may-alias: {0,1}]
  %s1 = inlined_call_operand.vmem [shape: f32[2,9,4,16,4], index: 1, kind: input, shape index: {}, may-alias: {0,1}]
  %s2 = inlined_call_operand.vmem [shape: f32[9,1,4], index: 2, kind: input, shape index: {}]
  %s3 = inlined_call_operand.vmem [shape: f32[4,8], index: 3, kind: input, shape index: {}]
  %s4 = inlined_call_operand.vmem [shape: f32[1,8], index: 4, kind: input, shape index: {}]
  %s5 = inlined_call_operand.hbm [shape: f32[2,8,8,8], index: 5, kind: output, shape index: {}]
  %s6 = sld [smem:[#allocation0]]
  $region53: #{_lambda_.1} parent=0
    _
  %s8 = ssub.s32 1, %s6
  %s9 = scalar_select 0, %s8, %s6
  $region1: #{_lambda_.1} parent=0
    #allocation2 [shape = 'u8[65536]{0}', space=vmem, size = 0x10000, scoped, tag = 'output window, operand 0']
    #allocation3 [shape = 's32[2]{0}', space=sflag, size = 0x8, scoped, tag = 'scoped memory for _lambda_.1']
    %10 = vsyncpa [#allocation3], 0
    %s11 = scalar_lea.sflag [#allocation3], 1
    %12 = vsyncpa %s11, 0
    loop: start=0, step=1, limit=4
    $region2: #{_lambda_.1} parent=1 // loop_pre_header
      _
    $region3: #{_lambda_.1} parent=1 // loop_header
      %s14 = sphi 0, %s18
      %p15 = scmp.ge.s32.totalorder %s14, 4
      %s21 = sphi 0, %s33
      %s22 = sphi 0, %s29
      %s23 = sphi 0, %s21
      %s24 = sphi 0, %s22
      %s25 = sphi 0, %s23
      %s26 = sphi 0, %s24
      %s38 = sphi 0, %s40
      %s41 = sphi 0, %s38
      %s42 = sphi 0, %s41
      %s58 = sphi 0, %s42
      %s70 = sphi 0, %s72
      %s73 = sphi 0, %s70
      %s74 = sphi 0, %s73
      %s90 = sphi 0, %s74
      %s94 = sphi 0, %s94
      %s96 = sphi 0, %s94
      %s97 = sphi 0, %s96
      %s111 = sphi 0, %s97
      %s115 = sphi 0, %s115
      %s117 = sphi 0, %s115
      %s118 = sphi 0, %s117
      %s132 = sphi 0, %s118
      %s136 = sphi 0, %s136
      %s138 = sphi 0, %s136
      %s139 = sphi 0, %s138
      %s153 = sphi 0, %s139
      %s161 = sphi 0, %s163
      %s164 = sphi 0, %s161
      %s165 = sphi 0, %s164
      %s181 = sphi 0, %s165
    $region4: #{_lambda_.1} parent=1 // loop_header_branch
      %17 = sbr.rel (%p15) target = $region8
    $region5: #{_lambda_.1} parent=1 // loop_body
      %s19 = ssub.s32 %s14, 1
      %s20 = ssub.s32 %s14, 2
      %s27 = sadd.s32 1, %s22
      %p28 = scmp.ge.s32.totalorder %s27, 1
      %s29 = scalar_select %p28, 0, %s27
      %s30 = sadd.s32 1, %s21
      %s31 = scalar_select %p28, %s30, %s21
      %p32 = scmp.ge.s32.totalorder %s31, 2
      %s33 = scalar_select %p32, 0, %s31
      %s34 = ssub.s32 %s21, %s33
      %s35 = ssub.s32 %s22, %s29
      %s36 = sor.u32 %s34, %s35
      %p37 = scmp.eq.s32.totalorder %s36, 0
      %s39 = sadd.s32 %s38, 1
      %s40 = scalar_select %p37, %s38, %s39
      %p43 = pneg %p37
      %p44 = scmp.eq.s32.totalorder %s14, 1
      %p45 = por %p43, %p44
      %p46 = scmp.ne.s32.totalorder %s38, %s41
      %p47 = scmp.eq.s32.totalorder %s14, 0
      %p48 = por %p46, %p47
      %p49 = scmp.ne.s32.totalorder %s38, %s41
      %p50 = scmp.eq.s32.totalorder %s19, 1
      %p51 = por %p49, %p50
      %p52 = scmp.ne.s32.totalorder %s41, %s42
      %p53 = scmp.eq.s32.totalorder %s19, 0
      %p54 = por %p52, %p53
      %p55 = scmp.ne.s32.totalorder %s41, %s42
      %p56 = scmp.eq.s32.totalorder %s20, 1
      %p57 = por %p55, %p56
      %p59 = scmp.ne.s32.totalorder %s42, %s58
      %p60 = scmp.eq.s32.totalorder %s20, 0
      %p61 = por %p59, %p60
      %s62 = sadd.s32 %s22, 1
      %s63 = smul.u32 %s62, 8
      %s64 = sadd.s32 %s29, 1
      %s65 = smul.u32 %s64, 8
      %s66 = ssub.s32 %s21, %s33
      %s67 = ssub.s32 %s63, %s65
      %s68 = sor.u32 %s66, %s67
      %p69 = scmp.eq.s32.totalorder %s68, 0
      %s71 = sadd.s32 %s70, 1
      %s72 = scalar_select %p69, %s70, %s71
      %p75 = pneg %p69
      %p76 = scmp.eq.s32.totalorder %s14, 1
      %p77 = por %p75, %p76
      %p78 = scmp.ne.s32.totalorder %s70, %s73
      %p79 = scmp.eq.s32.totalorder %s14, 0
      %p80 = por %p78, %p79
      %p81 = scmp.ne.s32.totalorder %s70, %s73
      %p82 = scmp.eq.s32.totalorder %s19, 1
      %p83 = por %p81, %p82
      %p84 = scmp.ne.s32.totalorder %s73, %s74
      %p85 = scmp.eq.s32.totalorder %s19, 0
      %p86 = por %p84, %p85
      %p87 = scmp.ne.s32.totalorder %s73, %s74
      %p88 = scmp.eq.s32.totalorder %s20, 1
      %p89 = por %p87, %p88
      %p91 = scmp.ne.s32.totalorder %s74, %s90
      %p92 = scmp.eq.s32.totalorder %s20, 0
      %p93 = por %p91, %p92
      %s95 = sadd.s32 %s94, 1
      %p98 = scmp.eq.s32.totalorder %s14, 1
      %p99 = scmp.ne.s32.totalorder %s94, %s96
      %p100 = scmp.eq.s32.totalorder %s14, 0
      %p101 = por %p99, %p100
      %p102 = scmp.ne.s32.totalorder %s94, %s96
      %p103 = scmp.eq.s32.totalorder %s19, 1
      %p104 = por %p102, %p103
      %p105 = scmp.ne.s32.totalorder %s96, %s97
      %p106 = scmp.eq.s32.totalorder %s19, 0
      %p107 = por %p105, %p106
      %p108 = scmp.ne.s32.totalorder %s96, %s97
      %p109 = scmp.eq.s32.totalorder %s20, 1
      %p110 = por %p108, %p109
      %p112 = scmp.ne.s32.totalorder %s97, %s111
      %p113 = scmp.eq.s32.totalorder %s20, 0
      %p114 = por %p112, %p113
      %s116 = sadd.s32 %s115, 1
      %p119 = scmp.eq.s32.totalorder %s14, 1
      %p120 = scmp.ne.s32.totalorder %s115, %s117
      %p121 = scmp.eq.s32.totalorder %s14, 0
      %p122 = por %p120, %p121
      %p123 = scmp.ne.s32.totalorder %s115, %s117
      %p124 = scmp.eq.s32.totalorder %s19, 1
      %p125 = por %p123, %p124
      %p126 = scmp.ne.s32.totalorder %s117, %s118
      %p127 = scmp.eq.s32.totalorder %s19, 0
      %p128 = por %p126, %p127
      %p129 = scmp.ne.s32.totalorder %s117, %s118
      %p130 = scmp.eq.s32.totalorder %s20, 1
      %p131 = por %p129, %p130
      %p133 = scmp.ne.s32.totalorder %s118, %s132
      %p134 = scmp.eq.s32.totalorder %s20, 0
      %p135 = por %p133, %p134
      %s137 = sadd.s32 %s136, 1
      %p140 = scmp.eq.s32.totalorder %s14, 1
      %p141 = scmp.ne.s32.totalorder %s136, %s138
      %p142 = scmp.eq.s32.totalorder %s14, 0
      %p143 = por %p141, %p142
      %p144 = scmp.ne.s32.totalorder %s136, %s138
      %p145 = scmp.eq.s32.totalorder %s19, 1
      %p146 = por %p144, %p145
      %p147 = scmp.ne.s32.totalorder %s138, %s139
      %p148 = scmp.eq.s32.totalorder %s19, 0
      %p149 = por %p147, %p148
      %p150 = scmp.ne.s32.totalorder %s138, %s139
      %p151 = scmp.eq.s32.totalorder %s20, 1
      %p152 = por %p150, %p151
      %p154 = scmp.ne.s32.totalorder %s139, %s153
      %p155 = scmp.eq.s32.totalorder %s20, 0
      %p156 = por %p154, %p155
      %s157 = ssub.s32 %s21, %s33
      %s158 = ssub.s32 %s22, %s29
      %s159 = sor.u32 %s157, %s158
      %p160 = scmp.eq.s32.totalorder %s159, 0
      %s162 = sadd.s32 %s161, 1
      %s163 = scalar_select %p160, %s161, %s162
      %p166 = pneg %p160
      %p167 = scmp.eq.s32.totalorder %s14, 1
      %p168 = por %p166, %p167
      %p169 = scmp.ne.s32.totalorder %s161, %s164
      %p170 = scmp.eq.s32.totalorder %s14, 0
      %p171 = por %p169, %p170
      %p172 = scmp.ne.s32.totalorder %s161, %s164
      %p173 = scmp.eq.s32.totalorder %s19, 1
      %p174 = por %p172, %p173
      %p175 = scmp.ne.s32.totalorder %s164, %s165
      %p176 = scmp.eq.s32.totalorder %s19, 0
      %p177 = por %p175, %p176
      %p178 = scmp.ne.s32.totalorder %s164, %s165
      %p179 = scmp.eq.s32.totalorder %s20, 1
      %p180 = por %p178, %p179
      %p182 = scmp.ne.s32.totalorder %s165, %s181
      %p183 = scmp.eq.s32.totalorder %s20, 0
      %p184 = por %p182, %p183
      %p185 = scmp.le.s32.totalorder 1, %s14
      %p186 = scmp.lt.s32.totalorder %s14, 3
      %p187 = pnand %p185, %p186
      %p188 = pneg %p187
      // Predicated region
      $region9: #{_lambda_.1} parent=5 // pred_check
        _
      $region10: #{_lambda_.1} parent=5 // pred_check_branch
        %190 = sbr.rel (%p187) target = $region12
      $region11: #{_lambda_.1} parent=5 // pred_region
        %s191 = ssub.s32 %s14, 1
        // Predicated region
        $region13: #{_lambda_.1} parent=11 // pred_check
          %p192 = pneg %p107
        $region14: #{_lambda_.1} parent=11 // pred_check_branch
          %194 = sbr.rel (%p192) target = $region16
        $region15: #{_lambda_.1} parent=11 // pred_region
          _
        $region16: #{_lambda_.1} parent=11 // pred_fallthru
          _
        // Predicated region
        $region17: #{_lambda_.1} parent=11 // pred_check
          %p195 = pneg %p128
        $region18: #{_lambda_.1} parent=11 // pred_check_branch
          %197 = sbr.rel (%p195) target = $region20
        $region19: #{_lambda_.1} parent=11 // pred_region
          _
        $region20: #{_lambda_.1} parent=11 // pred_fallthru
          _
        // Predicated region
        $region21: #{_lambda_.1} parent=11 // pred_check
          %p198 = pneg %p149
        $region22: #{_lambda_.1} parent=11 // pred_check_branch
          %200 = sbr.rel (%p198) target = $region24
        $region23: #{_lambda_.1} parent=11 // pred_region
          _
        $region24: #{_lambda_.1} parent=11 // pred_fallthru
          _
      $region12: #{_lambda_.1} parent=5 // pred_fallthru
        _
      %p201 = scmp.lt.s32.totalorder %s14, 2
      // Predicated region
      $region25: #{_lambda_.1} parent=5 // pred_check
        %p202 = pneg %p201
      $region26: #{_lambda_.1} parent=5 // pred_check_branch
        %204 = sbr.rel (%p202) target = $region28
      $region27: #{_lambda_.1} parent=5 // pred_region
        // Predicated region
        $region29: #{_lambda_.1} parent=27 // pred_check
          %p205 = pneg %p48
        $region30: #{_lambda_.1} parent=27 // pred_check_branch
          %207 = sbr.rel (%p205) target = $region32
        $region31: #{_lambda_.1} parent=27 // pred_region
          %s208 = smul.u32 8, %s22
          %s209 = ssub.s32 9, %s208
          %p210 = scmp.lt.s32.totalorder %s209, 8
          %s211 = scalar_select %p210, %s209, 8
          %s212 = smul.u32 128, %s211
          %s213 = smul.u32 %s212, 4
          %s214 = smul.u32 %s213, 2
          %p215 = scmp.lt.s32.totalorder %s21, 1
          %s216 = scalar_select %p215, %s21, 1
          %p217 = scmp.lt.s32.totalorder %s208, 8
          %s218 = scalar_select %p217, %s208, 8
          %s219 = smul.addr %s218, 8
          %s220 = smul.addr %s216, 72
          %s221 = sadd.s32 %s219, %s220
          %s222 = smul.addr %s221, 8
          %s223 = scalar_lea.vmem %s0, %s222
          %s224 = smul.u32 8, %s22
          %s225 = ssub.s32 9, %s224
          %p226 = scmp.lt.s32.totalorder %s225, 8
          %s227 = scalar_select %p226, %s225, 8
          %s228 = smul.u32 128, %s227
          %s229 = smul.u32 %s228, 4
          %s230 = smul.u32 %s229, 2
        $region32: #{_lambda_.1} parent=27 // pred_fallthru
          _
        // Predicated region
        $region33: #{_lambda_.1} parent=27 // pred_check
          %p231 = pneg %p80
        $region34: #{_lambda_.1} parent=27 // pred_check_branch
          %233 = sbr.rel (%p231) target = $region36
        $region35: #{_lambda_.1} parent=27 // pred_region
          %s234 = sadd.s32 %s22, 1
          %s235 = smul.u32 %s234, 8
          %p236 = scmp.lt.s32.totalorder %s21, 1
          %s237 = scalar_select %p236, %s21, 1
          %p238 = scmp.lt.s32.totalorder %s235, 8
          %s239 = scalar_select %p238, %s235, 8
          %s240 = smul.addr %s239, 8
          %s241 = smul.addr %s237, 72
          %s242 = sadd.s32 %s240, %s241
          %s243 = smul.addr %s242, 8
          %s244 = scalar_lea.vmem %s1, %s243
          %s245 = sadd.s32 %s22, 1
          %s246 = smul.u32 %s245, 8
        $region36: #{_lambda_.1} parent=27 // pred_fallthru
          _
      $region28: #{_lambda_.1} parent=5 // pred_fallthru
        _
      %p247 = scmp.le.s32.totalorder 1, %s14
      %p248 = scmp.lt.s32.totalorder %s14, 3
      %p249 = pnand %p247, %p248
      %p250 = pneg %p249
      // Predicated region
      $region37: #{_lambda_.1} parent=5 // pred_check
        _
      $region38: #{_lambda_.1} parent=5 // pred_check_branch
        %252 = sbr.rel (%p249) target = $region40
      $region39: #{_lambda_.1} parent=5 // pred_region
        %s253 = ssub.s32 %s14, 1
        %s254 = smul.u32 8, %s24
        %s255 = ssub.s32 9, %s254
        %p256 = scmp.lt.s32.totalorder %s255, 8
        %s257 = scalar_select %p256, %s255, 8
        %s258 = smul.u32 128, %s257
        %s259 = smul.u32 %s258, 4
        %s260 = smul.u32 %s259, 2
        %p261 = scmp.lt.s32.totalorder %s23, 1
        %s262 = scalar_select %p261, %s23, 1
        %p263 = scmp.lt.s32.totalorder %s254, 8
        %s264 = scalar_select %p263, %s254, 8
        %s265 = smul.addr %s264, 8
        %s266 = smul.addr %s262, 72
        %s267 = sadd.s32 %s265, %s266
        %s268 = smul.addr %s267, 8
        %s269 = scalar_lea.vmem %s0, %s268
        %p270 = pneg %p54
        %p271 = pneg %p51
        %s272 = sadd.s32 %s24, 1
        %s273 = smul.u32 %s272, 8
        %p274 = scmp.lt.s32.totalorder %s23, 1
        %s275 = scalar_select %p274, %s23, 1
        %p276 = scmp.lt.s32.totalorder %s273, 8
        %s277 = scalar_select %p276, %s273, 8
        %s278 = smul.addr %s277, 8
        %s279 = smul.addr %s275, 72
        %s280 = sadd.s32 %s278, %s279
        %s281 = smul.addr %s280, 8
        %s282 = scalar_lea.vmem %s1, %s281
        %p283 = pneg %p86
        %p284 = pneg %p83
        %p285 = pneg %p107
        %p286 = pneg %p104
        %p287 = pneg %p128
        %p288 = pneg %p125
        %p289 = pneg %p149
        %p290 = pneg %p146
        %p291 = pneg %p177
        %p292 = pneg %p174
        %s293 = sand.u32 %s164, 1
        %s294 = scalar_lea.sflag [#allocation3], %s293
        %s295 = sand.u32 %s164, 1
        %s296 = smul.addr %s295, 64
        %s297 = scalar_lea.vmem [#allocation2], %s296
        %s298 = smul.u32 8, %s24
        %s299 = ssub.s32 9, %s298
        %p300 = scmp.lt.s32.totalorder %s299, 8
        %s301 = scalar_select %p300, %s299, 8
        %s302 = smul.u32 128, %s301
        %s303 = smul.u32 %s302, 4
        %s304 = smul.u32 %s303, 2
        %p305 = scmp.lt.s32.totalorder %s23, 1
        %s306 = scalar_select %p305, %s23, 1
        %p307 = scmp.lt.s32.totalorder %s298, 8
        %s308 = scalar_select %p307, %s298, 8
        %s309 = smul.addr %s308, 8
        %s310 = smul.addr %s306, 72
        %s311 = sadd.s32 %s309, %s310
        %s312 = smul.addr %s311, 8
        %s313 = scalar_lea.vmem %s0, %s312
        %s314 = smul.u32 8, %s24
        %s315 = ssub.s32 9, %s314
        %p316 = scmp.lt.s32.totalorder %s315, 8
        %s317 = scalar_select %p316, %s315, 8
        %s318 = smul.u32 128, %s317
        %s319 = smul.u32 %s318, 4
        %s320 = smul.u32 %s319, 2
        %s321 = sadd.s32 %s24, 1
        %s322 = smul.u32 %s321, 8
        %p323 = scmp.lt.s32.totalorder %s23, 1
        %s324 = scalar_select %p323, %s23, 1
        %p325 = scmp.lt.s32.totalorder %s322, 8
        %s326 = scalar_select %p325, %s322, 8
        %s327 = smul.addr %s326, 8
        %s328 = smul.addr %s324, 72
        %s329 = sadd.s32 %s327, %s328
        %s330 = smul.addr %s329, 8
        %s331 = scalar_lea.vmem %s1, %s330
        %s332 = sadd.s32 %s24, 1
        %s333 = smul.u32 %s332, 8
        %s334 = smul.u32 8, %s24
        %v335 = vld [vmem:[%s2] sm:$0x1]
        %v336 = vld [vmem:[%s2 + $0x1] sm:$0x1]
        %v337 = vld [vmem:[%s2 + $0x2] sm:$0x1]
        %v338 = vld [vmem:[%s2 + $0x3] sm:$0x1]
        %v339 = vld [vmem:[%s2 + $0x4] sm:$0x1]
        %v340 = vld [vmem:[%s2 + $0x5] sm:$0x1]
        %v341 = vld [vmem:[%s2 + $0x6] sm:$0x1]
        %v342 = vld [vmem:[%s2 + $0x7] sm:$0x1]
        %v343 = vld [vmem:[%s2 + $0x8] sm:$0x1]
        %v344 = vld [vmem:[%s313] sm:$0xff]
        %v345 = vld [vmem:[%s313 + $0x8] sm:$0xff]
        %v346 = vld [vmem:[%s313 + $0x40] sm:$0xff]
        %v347 = vld [vmem:[%s313 + $0x48] sm:$0xff]
        %v348 = vld [vmem:[%s313 + $0x80] sm:$0xff]
        %v349 = vld [vmem:[%s313 + $0x88] sm:$0xff]
        %v350 = vld [vmem:[%s313 + $0xc0] sm:$0xff]
        %v351 = vld [vmem:[%s313 + $0xc8] sm:$0xff]
        %v352 = vld [vmem:[%s313 + $0x100] sm:$0xff]
        %v353 = vld [vmem:[%s313 + $0x108] sm:$0xff]
        %v354 = vld [vmem:[%s313 + $0x140] sm:$0xff]
        %v355 = vld [vmem:[%s313 + $0x148] sm:$0xff]
        %v356 = vld [vmem:[%s313 + $0x180] sm:$0xff]
        %v357 = vld [vmem:[%s313 + $0x188] sm:$0xff]
        %v358 = vld [vmem:[%s313 + $0x1c0] sm:$0xff]
        %v359 = vld [vmem:[%s313 + $0x1c8] sm:$0xff]
        %v361 = vlaneseq
        %v362 = vshrl.u32 %v361, 7
        %v363 = vsub.s32 0, %v362
        %v364 = vrot.slane %v335, %v363
        %v366 = vmul.f32 %v344, %v364
        %v367 = vmul.f32 %v346, %v364
        %v368 = vmul.f32 %v348, %v364
        %v369 = vmul.f32 %v350, %v364
        %v370 = vmul.f32 %v352, %v364
        %v371 = vmul.f32 %v354, %v364
        %v372 = vmul.f32 %v356, %v364
        %v373 = vmul.f32 %v358, %v364
        %s374 = scalar_lea.vmem %s313, 16
        %v375 = vld [vmem:[%s374] sm:$0xff]
        %v376 = vld [vmem:[%s374 + $0x40] sm:$0xff]
        %v377 = vld [vmem:[%s374 + $0x80] sm:$0xff]
        %v378 = vld [vmem:[%s374 + $0xc0] sm:$0xff]
        %v379 = vld [vmem:[%s374 + $0x100] sm:$0xff]
        %v380 = vld [vmem:[%s374 + $0x140] sm:$0xff]
        %v381 = vld [vmem:[%s374 + $0x180] sm:$0xff]
        %v382 = vld [vmem:[%s374 + $0x1c0] sm:$0xff]
        %v384 = vlaneseq
        %v385 = vshrl.u32 %v384, 7
        %v386 = vsub.s32 0, %v385
        %v387 = vrot.slane %v336, %v386
        %v389 = vmul.f32 %v375, %v387
        %v390 = vmul.f32 %v376, %v387
        %v391 = vmul.f32 %v377, %v387
        %v392 = vmul.f32 %v378, %v387
        %v393 = vmul.f32 %v379, %v387
        %v394 = vmul.f32 %v380, %v387
        %v395 = vmul.f32 %v381, %v387
        %v396 = vmul.f32 %v382, %v387
        %v397 = vadd.f32 %v366, %v389
        %v398 = vadd.f32 %v367, %v390
        %v399 = vadd.f32 %v368, %v391
        %v400 = vadd.f32 %v369, %v392
        %v401 = vadd.f32 %v370, %v393
        %v402 = vadd.f32 %v371, %v394
        %v403 = vadd.f32 %v372, %v395
        %v404 = vadd.f32 %v373, %v396
        %v406 = vlaneseq
        %v407 = vshrl.u32 %v406, 7
        %v408 = vsub.s32 0, %v407
        %v409 = vrot.slane %v337, %v408
        %v411 = vmul.f32 %v344, %v409
        %v412 = vmul.f32 %v345, %v409
        %v413 = vmul.f32 %v346, %v409
        %v414 = vmul.f32 %v347, %v409
        %v415 = vmul.f32 %v348, %v409
        %v416 = vmul.f32 %v349, %v409
        %v417 = vmul.f32 %v350, %v409
        %v418 = vmul.f32 %v351, %v409
        %v419 = vmul.f32 %v352, %v409
        %v420 = vmul.f32 %v353, %v409
        %v421 = vmul.f32 %v354, %v409
        %v422 = vmul.f32 %v355, %v409
        %v423 = vmul.f32 %v356, %v409
        %v424 = vmul.f32 %v357, %v409
        %v425 = vmul.f32 %v358, %v409
        %v426 = vmul.f32 %v359, %v409
        %vm443 = vcmask 1046528
        %v444 = vrot.slane %v411, 1
        %v445 = vrot.slane %v412, 1
        %v446 = vsel %vm443, %v444, %v445
        %v447 = vrot.slane %v413, 1
        %v448 = vrot.slane %v414, 1
        %v449 = vsel %vm443, %v447, %v448
        %v450 = vrot.slane %v415, 1
        %v451 = vrot.slane %v416, 1
        %v452 = vsel %vm443, %v450, %v451
        %v453 = vrot.slane %v417, 1
        %v454 = vrot.slane %v418, 1
        %v455 = vsel %vm443, %v453, %v454
        %v456 = vrot.slane %v419, 1
        %v457 = vrot.slane %v420, 1
        %v458 = vsel %vm443, %v456, %v457
        %v459 = vrot.slane %v421, 1
        %v460 = vrot.slane %v422, 1
        %v461 = vsel %vm443, %v459, %v460
        %v462 = vrot.slane %v423, 1
        %v463 = vrot.slane %v424, 1
        %v464 = vsel %vm443, %v462, %v463
        %v465 = vrot.slane %v425, 1
        %v466 = vrot.slane %v426, 1
        %v467 = vsel %vm443, %v465, %v466
        %v476 = vadd.f32 %v397, %v446
        %v477 = vadd.f32 %v398, %v449
        %v478 = vadd.f32 %v399, %v452
        %v479 = vadd.f32 %v400, %v455
        %v480 = vadd.f32 %v401, %v458
        %v481 = vadd.f32 %v402, %v461
        %v482 = vadd.f32 %v403, %v464
        %v483 = vadd.f32 %v404, %v467
        %s484 = scalar_lea.vmem %s313, 32
        %v485 = vld [vmem:[%s484] sm:$0xff]
        %v486 = vld [vmem:[%s484 + $0x8] sm:$0xff]
        %v487 = vld [vmem:[%s484 + $0x40] sm:$0xff]
        %v488 = vld [vmem:[%s484 + $0x48] sm:$0xff]
        %v489 = vld [vmem:[%s484 + $0x80] sm:$0xff]
        %v490 = vld [vmem:[%s484 + $0x88] sm:$0xff]
        %v491 = vld [vmem:[%s484 + $0xc0] sm:$0xff]
        %v492 = vld [vmem:[%s484 + $0xc8] sm:$0xff]
        %v493 = vld [vmem:[%s484 + $0x100] sm:$0xff]
        %v494 = vld [vmem:[%s484 + $0x108] sm:$0xff]
        %v495 = vld [vmem:[%s484 + $0x140] sm:$0xff]
        %v496 = vld [vmem:[%s484 + $0x148] sm:$0xff]
        %v497 = vld [vmem:[%s484 + $0x180] sm:$0xff]
        %v498 = vld [vmem:[%s484 + $0x188] sm:$0xff]
        %v499 = vld [vmem:[%s484 + $0x1c0] sm:$0xff]
        %v500 = vld [vmem:[%s484 + $0x1c8] sm:$0xff]
        %v502 = vlaneseq
        %v503 = vshrl.u32 %v502, 7
        %v504 = vsub.s32 0, %v503
        %v505 = vrot.slane %v338, %v504
        %v507 = vmul.f32 %v485, %v505
        %v508 = vmul.f32 %v487, %v505
        %v509 = vmul.f32 %v489, %v505
        %v510 = vmul.f32 %v491, %v505
        %v511 = vmul.f32 %v493, %v505
        %v512 = vmul.f32 %v495, %v505
        %v513 = vmul.f32 %v497, %v505
        %v514 = vmul.f32 %v499, %v505
        %s515 = scalar_lea.vmem %s313, 48
        %v516 = vld [vmem:[%s515] sm:$0xff]
        %v517 = vld [vmem:[%s515 + $0x40] sm:$0xff]
        %v518 = vld [vmem:[%s515 + $0x80] sm:$0xff]
        %v519 = vld [vmem:[%s515 + $0xc0] sm:$0xff]
        %v520 = vld [vmem:[%s515 + $0x100] sm:$0xff]
        %v521 = vld [vmem:[%s515 + $0x140] sm:$0xff]
        %v522 = vld [vmem:[%s515 + $0x180] sm:$0xff]
        %v523 = vld [vmem:[%s515 + $0x1c0] sm:$0xff]
        %v525 = vlaneseq
        %v526 = vshrl.u32 %v525, 7
        %v527 = vsub.s32 0, %v526
        %v528 = vrot.slane %v339, %v527
        %v530 = vmul.f32 %v516, %v528
        %v531 = vmul.f32 %v517, %v528
        %v532 = vmul.f32 %v518, %v528
        %v533 = vmul.f32 %v519, %v528
        %v534 = vmul.f32 %v520, %v528
        %v535 = vmul.f32 %v521, %v528
        %v536 = vmul.f32 %v522, %v528
        %v537 = vmul.f32 %v523, %v528
        %v538 = vadd.f32 %v507, %v530
        %v539 = vadd.f32 %v508, %v531
        %v540 = vadd.f32 %v509, %v532
        %v541 = vadd.f32 %v510, %v533
        %v542 = vadd.f32 %v511, %v534
        %v543 = vadd.f32 %v512, %v535
        %v544 = vadd.f32 %v513, %v536
        %v545 = vadd.f32 %v514, %v537
        %v547 = vlaneseq
        %v548 = vshrl.u32 %v547, 7
        %v549 = vsub.s32 0, %v548
        %v550 = vrot.slane %v340, %v549
        %v552 = vmul.f32 %v485, %v550
        %v553 = vmul.f32 %v486, %v550
        %v554 = vmul.f32 %v487, %v550
        %v555 = vmul.f32 %v488, %v550
        %v556 = vmul.f32 %v489, %v550
        %v557 = vmul.f32 %v490, %v550
        %v558 = vmul.f32 %v491, %v550
        %v559 = vmul.f32 %v492, %v550
        %v560 = vmul.f32 %v493, %v550
        %v561 = vmul.f32 %v494, %v550
        %v562 = vmul.f32 %v495, %v550
        %v563 = vmul.f32 %v496, %v550
        %v564 = vmul.f32 %v497, %v550
        %v565 = vmul.f32 %v498, %v550
        %v566 = vmul.f32 %v499, %v550
        %v567 = vmul.f32 %v500, %v550
        %v584 = vrot.slane %v552, 1
        %v585 = vrot.slane %v553, 1
        %v586 = vsel %vm443, %v584, %v585
        %v587 = vrot.slane %v554, 1
        %v588 = vrot.slane %v555, 1
        %v589 = vsel %vm443, %v587, %v588
        %v590 = vrot.slane %v556, 1
        %v591 = vrot.slane %v557, 1
        %v592 = vsel %vm443, %v590, %v591
        %v593 = vrot.slane %v558, 1
        %v594 = vrot.slane %v559, 1
        %v595 = vsel %vm443, %v593, %v594
        %v596 = vrot.slane %v560, 1
        %v597 = vrot.slane %v561, 1
        %v598 = vsel %vm443, %v596, %v597
        %v599 = vrot.slane %v562, 1
        %v600 = vrot.slane %v563, 1
        %v601 = vsel %vm443, %v599, %v600
        %v602 = vrot.slane %v564, 1
        %v603 = vrot.slane %v565, 1
        %v604 = vsel %vm443, %v602, %v603
        %v605 = vrot.slane %v566, 1
        %v606 = vrot.slane %v567, 1
        %v607 = vsel %vm443, %v605, %v606
        %v616 = vadd.f32 %v538, %v586
        %v617 = vadd.f32 %v539, %v589
        %v618 = vadd.f32 %v540, %v592
        %v619 = vadd.f32 %v541, %v595
        %v620 = vadd.f32 %v542, %v598
        %v621 = vadd.f32 %v543, %v601
        %v622 = vadd.f32 %v544, %v604
        %v623 = vadd.f32 %v545, %v607
        %v624 = vadd.f32 %v476, %v616
        %v625 = vadd.f32 %v477, %v617
        %v626 = vadd.f32 %v478, %v618
        %v627 = vadd.f32 %v479, %v619
        %v628 = vadd.f32 %v480, %v620
        %v629 = vadd.f32 %v481, %v621
        %v630 = vadd.f32 %v482, %v622
        %v631 = vadd.f32 %v483, %v623
        %s632 = scalar_lea.vmem %s313, 64
        %v633 = vld [vmem:[%s632] sm:$0xff]
        %v634 = vld [vmem:[%s632 + $0x8] sm:$0xff]
        %v635 = vld [vmem:[%s632 + $0x40] sm:$0xff]
        %v636 = vld [vmem:[%s632 + $0x48] sm:$0xff]
        %v637 = vld [vmem:[%s632 + $0x80] sm:$0xff]
        %v638 = vld [vmem:[%s632 + $0x88] sm:$0xff]
        %v639 = vld [vmem:[%s632 + $0xc0] sm:$0xff]
        %v640 = vld [vmem:[%s632 + $0xc8] sm:$0xff]
        %v641 = vld [vmem:[%s632 + $0x100] sm:$0xff]
        %v642 = vld [vmem:[%s632 + $0x108] sm:$0xff]
        %v643 = vld [vmem:[%s632 + $0x140] sm:$0xff]
        %v644 = vld [vmem:[%s632 + $0x148] sm:$0xff]
        %v645 = vld [vmem:[%s632 + $0x180] sm:$0xff]
        %v646 = vld [vmem:[%s632 + $0x188] sm:$0xff]
        %v647 = vld [vmem:[%s331] sm:$0xff]
        %v648 = vld [vmem:[%s331 + $0x8] sm:$0xff]
        %v650 = vlaneseq
        %v651 = vshrl.u32 %v650, 7
        %v652 = vsub.s32 0, %v651
        %v653 = vrot.slane %v341, %v652
        %v655 = vmul.f32 %v633, %v653
        %v656 = vmul.f32 %v635, %v653
        %v657 = vmul.f32 %v637, %v653
        %v658 = vmul.f32 %v639, %v653
        %v659 = vmul.f32 %v641, %v653
        %v660 = vmul.f32 %v643, %v653
        %v661 = vmul.f32 %v645, %v653
        %v662 = vmul.f32 %v647, %v653
        %s663 = scalar_lea.vmem %s313, 80
        %v664 = vld [vmem:[%s663] sm:$0xff]
        %v665 = vld [vmem:[%s663 + $0x40] sm:$0xff]
        %v666 = vld [vmem:[%s663 + $0x80] sm:$0xff]
        %v667 = vld [vmem:[%s663 + $0xc0] sm:$0xff]
        %v668 = vld [vmem:[%s663 + $0x100] sm:$0xff]
        %v669 = vld [vmem:[%s663 + $0x140] sm:$0xff]
        %v670 = vld [vmem:[%s663 + $0x180] sm:$0xff]
        %s671 = scalar_lea.vmem %s331, 16
        %v672 = vld [vmem:[%s671] sm:$0xff]
        %v674 = vlaneseq
        %v675 = vshrl.u32 %v674, 7
        %v676 = vsub.s32 0, %v675
        %v677 = vrot.slane %v342, %v676
        %v679 = vmul.f32 %v664, %v677
        %v680 = vmul.f32 %v665, %v677
        %v681 = vmul.f32 %v666, %v677
        %v682 = vmul.f32 %v667, %v677
        %v683 = vmul.f32 %v668, %v677
        %v684 = vmul.f32 %v669, %v677
        %v685 = vmul.f32 %v670, %v677
        %v686 = vmul.f32 %v672, %v677
        %v687 = vadd.f32 %v655, %v679
        %v688 = vadd.f32 %v656, %v680
        %v689 = vadd.f32 %v657, %v681
        %v690 = vadd.f32 %v658, %v682
        %v691 = vadd.f32 %v659, %v683
        %v692 = vadd.f32 %v660, %v684
        %v693 = vadd.f32 %v661, %v685
        %v694 = vadd.f32 %v662, %v686
        %v696 = vlaneseq
        %v697 = vshrl.u32 %v696, 7
        %v698 = vsub.s32 0, %v697
        %v699 = vrot.slane %v343, %v698
        %v701 = vmul.f32 %v633, %v699
        %v702 = vmul.f32 %v634, %v699
        %v703 = vmul.f32 %v635, %v699
        %v704 = vmul.f32 %v636, %v699
        %v705 = vmul.f32 %v637, %v699
        %v706 = vmul.f32 %v638, %v699
        %v707 = vmul.f32 %v639, %v699
        %v708 = vmul.f32 %v640, %v699
        %v709 = vmul.f32 %v641, %v699
        %v710 = vmul.f32 %v642, %v699
        %v711 = vmul.f32 %v643, %v699
        %v712 = vmul.f32 %v644, %v699
        %v713 = vmul.f32 %v645, %v699
        %v714 = vmul.f32 %v646, %v699
        %v715 = vmul.f32 %v647, %v699
        %v716 = vmul.f32 %v648, %v699
        %v733 = vrot.slane %v701, 1
        %v734 = vrot.slane %v702, 1
        %v735 = vsel %vm443, %v733, %v734
        %v736 = vrot.slane %v703, 1
        %v737 = vrot.slane %v704, 1
        %v738 = vsel %vm443, %v736, %v737
        %v739 = vrot.slane %v705, 1
        %v740 = vrot.slane %v706, 1
        %v741 = vsel %vm443, %v739, %v740
        %v742 = vrot.slane %v707, 1
        %v743 = vrot.slane %v708, 1
        %v744 = vsel %vm443, %v742, %v743
        %v745 = vrot.slane %v709, 1
        %v746 = vrot.slane %v710, 1
        %v747 = vsel %vm443, %v745, %v746
        %v748 = vrot.slane %v711, 1
        %v749 = vrot.slane %v712, 1
        %v750 = vsel %vm443, %v748, %v749
        %v751 = vrot.slane %v713, 1
        %v752 = vrot.slane %v714, 1
        %v753 = vsel %vm443, %v751, %v752
        %v754 = vrot.slane %v715, 1
        %v755 = vrot.slane %v716, 1
        %v756 = vsel %vm443, %v754, %v755
        %v765 = vadd.f32 %v687, %v735
        %v766 = vadd.f32 %v688, %v738
        %v767 = vadd.f32 %v689, %v741
        %v768 = vadd.f32 %v690, %v744
        %v769 = vadd.f32 %v691, %v747
        %v770 = vadd.f32 %v692, %v750
        %v771 = vadd.f32 %v693, %v753
        %v772 = vadd.f32 %v694, %v756
        %v773 = vadd.f32 %v624, %v765
        %v774 = vadd.f32 %v625, %v766
        %v775 = vadd.f32 %v626, %v767
        %v776 = vadd.f32 %v627, %v768
        %v777 = vadd.f32 %v628, %v769
        %v778 = vadd.f32 %v629, %v770
        %v779 = vadd.f32 %v630, %v771
        %v780 = vadd.f32 %v631, %v772
        %v781 = vld [vmem:[%s3] sm:$0xf]
        %v782 = vld [vmem:[%s4] sm:$0x1]
        %v784 = vlaneseq
        %v785 = vshrl.u32 %v784, 7
        %v786 = vsub.s32 0, %v785
        %v787 = vrot.slane %v782, %v786
        %vm789 = vcmask 31744
        %v791 = vsel %vm789, %v773, 0
        %v794 = vsel %vm789, %v774, 0
        %v797 = vsel %vm789, %v775, 0
        %v800 = vsel %vm789, %v776, 0
        %v803 = vsel %vm789, %v777, 0
        %v806 = vsel %vm789, %v778, 0
        %v809 = vsel %vm789, %v779, 0
        %v812 = vsel %vm789, %v780, 0
        %vm814 = vcmask 1043456
        %v816 = vsel %vm814, %v781, 0
        %818 = vmatprep.subr.mxu0 0.0
        %819 = vmatpush1.msra.mxu0 %v816
        %820 = vmatprep.subr.mxu0 0.0
        %821 = vmatpush1.msra.mxu0 0.0
        %822 = vmatprep.subr.mxu0 0.0
        %823 = vmatpush1.msra.mxu0 0.0
        %824 = vmatprep.subr.mxu0 0.0
        %825 = vmatpush1.msra.mxu0 0.0
        %826 = vmatprep.subr.mxu0 0.0
        %827 = vmatpush1.msra.mxu0 0.0
        %828 = vmatprep.subr.mxu0 0.0
        %829 = vmatpush1.msra.mxu0 0.0
        %830 = vmatprep.subr.mxu0 0.0
        %831 = vmatpush1.msra.mxu0 0.0
        %832 = vmatprep.subr.mxu0 0.0
        %833 = vmatpush1.msra.mxu0 0.0
        %834 = vmatprep.subr.mxu0 0.0
        %835 = vmatpush1.msra.mxu0 0.0
        %836 = vmatprep.subr.mxu0 0.0
        %837 = vmatpush1.msra.mxu0 0.0
        %838 = vmatprep.subr.mxu0 0.0
        %839 = vmatpush1.msra.mxu0 0.0
        %840 = vmatprep.subr.mxu0 0.0
        %841 = vmatpush1.msra.mxu0 0.0
        %842 = vmatprep.subr.mxu0 0.0
        %843 = vmatpush1.msra.mxu0 0.0
        %844 = vmatprep.subr.mxu0 0.0
        %845 = vmatpush1.msra.mxu0 0.0
        %846 = vmatprep.subr.mxu0 0.0
        %847 = vmatpush1.msra.mxu0 0.0
        %848 = vmatprep.subr.mxu0 0.0
        %849 = vmatpush1.msra.mxu0 0.0
        %850 = vmatprep.subr.mxu0 0.0
        %851 = vmatpush1.msra.mxu0 0.0
        %852 = vmatprep.subr.mxu0 0.0
        %853 = vmatpush1.msra.mxu0 0.0
        %854 = vmatprep.subr.mxu0 0.0
        %855 = vmatpush1.msra.mxu0 0.0
        %856 = vmatprep.subr.mxu0 0.0
        %857 = vmatpush1.msra.mxu0 0.0
        %858 = vmatprep.subr.mxu0 0.0
        %859 = vmatpush1.msra.mxu0 0.0
        %860 = vmatprep.subr.mxu0 0.0
        %861 = vmatpush1.msra.mxu0 0.0
        %862 = vmatprep.subr.mxu0 0.0
        %863 = vmatpush1.msra.mxu0 0.0
        %864 = vmatprep.subr.mxu0 0.0
        %865 = vmatpush1.msra.mxu0 0.0
        %866 = vmatprep.subr.mxu0 0.0
        %867 = vmatpush1.msra.mxu0 0.0
        %868 = vmatprep.subr.mxu0 0.0
        %869 = vmatpush1.msra.mxu0 0.0
        %870 = vmatprep.subr.mxu0 0.0
        %871 = vmatpush1.msra.mxu0 0.0
        %872 = vmatprep.subr.mxu0 0.0
        %873 = vmatpush1.msra.mxu0 0.0
        %874 = vmatprep.subr.mxu0 0.0
        %875 = vmatpush1.msra.mxu0 0.0
        %876 = vmatprep.subr.mxu0 0.0
        %877 = vmatpush1.msra.mxu0 0.0
        %878 = vmatprep.subr.mxu0 0.0
        %879 = vmatpush1.msra.mxu0 0.0
        %880 = vmatprep.subr.mxu0 0.0
        %881 = vmatpush1.msra.mxu0 0.0
        %882 = vmatprep.mubr.f32.mxu0 0.0
        %883 = vmatmul.mubr.f32.gmra.mrb[0].mxu0 %v791
        %v884 = vpop.f32.mrb[0].mxu0
        %v885 = vadd.f32 %v787, %v884
        %v886 = vpop.f32.mrb[0].mxu0
        %887 = vmatprep.mubr.f32.mxu0 0.0
        %888 = vmatmul.mubr.f32.gmra.mrb[0].mxu0 %v794
        %v889 = vpop.f32.mrb[0].mxu0
        %v890 = vadd.f32 %v787, %v889
        %v891 = vpop.f32.mrb[0].mxu0
        %892 = vmatprep.mubr.f32.mxu0 0.0
        %893 = vmatmul.mubr.f32.gmra.mrb[0].mxu0 %v797
        %v894 = vpop.f32.mrb[0].mxu0
        %v895 = vadd.f32 %v787, %v894
        %v896 = vpop.f32.mrb[0].mxu0
        %897 = vmatprep.mubr.f32.mxu0 0.0
        %898 = vmatmul.mubr.f32.gmra.mrb[0].mxu0 %v800
        %v899 = vpop.f32.mrb[0].mxu0
        %v900 = vadd.f32 %v787, %v899
        %v901 = vpop.f32.mrb[0].mxu0
        %902 = vmatprep.mubr.f32.mxu0 0.0
        %903 = vmatmul.mubr.f32.gmra.mrb[0].mxu0 %v803
        %v904 = vpop.f32.mrb[0].mxu0
        %v905 = vadd.f32 %v787, %v904
        %v906 = vpop.f32.mrb[0].mxu0
        %907 = vmatprep.mubr.f32.mxu0 0.0
        %908 = vmatmul.mubr.f32.gmra.mrb[0].mxu0 %v806
        %v909 = vpop.f32.mrb[0].mxu0
        %v910 = vadd.f32 %v787, %v909
        %v911 = vpop.f32.mrb[0].mxu0
        %912 = vmatprep.mubr.f32.mxu0 0.0
        %913 = vmatmul.mubr.f32.gmra.mrb[0].mxu0 %v809
        %v914 = vpop.f32.mrb[0].mxu0
        %v915 = vadd.f32 %v787, %v914
        %v916 = vpop.f32.mrb[0].mxu0
        %917 = vmatprep.mubr.f32.mxu0 0.0
        %918 = vmatmul.mubr.f32.gmra.mrb[0].mxu0 %v812
        %v919 = vpop.f32.mrb[0].mxu0
        %v920 = vadd.f32 %v787, %v919
        %v921 = vpop.f32.mrb[0].mxu0
        %922 = vdwg.mxu0
        %v923 = vxor.u32 %v885, 2147483648
        %v924 = vxor.u32 %v890, 2147483648
        %v925 = vxor.u32 %v895, 2147483648
        %v926 = vxor.u32 %v900, 2147483648
        %v927 = vxor.u32 %v905, 2147483648
        %v928 = vxor.u32 %v910, 2147483648
        %v929 = vxor.u32 %v915, 2147483648
        %v930 = vxor.u32 %v920, 2147483648
        %v931 = vmul.f32 %v923, 1.442695
        %v932 = vpow.pop %v931
        %v933 = vmul.f32 %v924, 1.442695
        %v934 = vpow.pop %v933
        %v935 = vmul.f32 %v925, 1.442695
        %v936 = vpow.pop %v935
        %v937 = vmul.f32 %v926, 1.442695
        %v938 = vpow.pop %v937
        %v939 = vmul.f32 %v927, 1.442695
        %v940 = vpow.pop %v939
        %v941 = vmul.f32 %v928, 1.442695
        %v942 = vpow.pop %v941
        %v943 = vmul.f32 %v929, 1.442695
        %v944 = vpow.pop %v943
        %v945 = vmul.f32 %v930, 1.442695
        %v946 = vpow.pop %v945
        %v947 = vadd.f32 %v932, 1.0
        %v948 = vadd.f32 %v934, 1.0
        %v949 = vadd.f32 %v936, 1.0
        %v950 = vadd.f32 %v938, 1.0
        %v951 = vadd.f32 %v940, 1.0
        %v952 = vadd.f32 %v942, 1.0
        %v953 = vadd.f32 %v944, 1.0
        %v954 = vadd.f32 %v946, 1.0
        %v955 = vrcp.pop %v947
        %v956 = vmul.f32 1.0, %v955
        %v957 = vrcp.pop %v948
        %v958 = vmul.f32 1.0, %v957
        %v959 = vrcp.pop %v949
        %v960 = vmul.f32 1.0, %v959
        %v961 = vrcp.pop %v950
        %v962 = vmul.f32 1.0, %v961
        %v963 = vrcp.pop %v951
        %v964 = vmul.f32 1.0, %v963
        %v965 = vrcp.pop %v952
        %v966 = vmul.f32 1.0, %v965
        %v967 = vrcp.pop %v953
        %v968 = vmul.f32 1.0, %v967
        %v969 = vrcp.pop %v954
        %v970 = vmul.f32 1.0, %v969
        %v971 = vmul.f32 %v885, %v956
        %v972 = vmul.f32 %v890, %v958
        %v973 = vmul.f32 %v895, %v960
        %v974 = vmul.f32 %v900, %v962
        %v975 = vmul.f32 %v905, %v964
        %v976 = vmul.f32 %v910, %v966
        %v977 = vmul.f32 %v915, %v968
        %v978 = vmul.f32 %v920, %v970
        %vm979 = vcmask 64512
        %980 = vst.msk [vmem:[%s297] sm:$0xff] %vm979, %v971
        %981 = vst.msk [vmem:[%s297 + $0x8] sm:$0xff] %vm979, %v972
        %982 = vst.msk [vmem:[%s297 + $0x10] sm:$0xff] %vm979, %v973
        %983 = vst.msk [vmem:[%s297 + $0x18] sm:$0xff] %vm979, %v974
        %984 = vst.msk [vmem:[%s297 + $0x20] sm:$0xff] %vm979, %v975
        %985 = vst.msk [vmem:[%s297 + $0x28] sm:$0xff] %vm979, %v976
        %986 = vst.msk [vmem:[%s297 + $0x30] sm:$0xff] %vm979, %v977
        %987 = vst.msk [vmem:[%s297 + $0x38] sm:$0xff] %vm979, %v978
        %s988 = sand.u32 %s164, 1
        %s989 = scalar_lea.sflag [#allocation3], %s988
        %s990 = sand.u32 %s164, 1
        %s991 = smul.addr %s990, 64
        %s992 = scalar_lea.vmem [#allocation2], %s991
        // Predicated region
        $region41: #{_lambda_.1} parent=39 // pred_check
          %p993 = pneg %p174
        $region42: #{_lambda_.1} parent=39 // pred_check_branch
          %995 = sbr.rel (%p993) target = $region44
        $region43: #{_lambda_.1} parent=39 // pred_region
          %s996 = smul.u32 8, %s24
          %s998 = ssub.s32 1024, 1024
          %999 = vsyncadd %s989, %s998
          %s1000 = smul.addr %s23, 8
          %s1001 = sadd.s32 %s996, %s1000
          %s1002 = smul.addr %s1001, 128
          %s1003 = scalar_lea.hbm %s5, %s1002
          %s1004 = sshll.u32 %s992, 4
          %s1005 = int_to_ptr.vmem [resolvable:$true] %s1004
          %1010 = dma.vmem_to_hbm [thread:$0]  %s1005, 1024, %s1003, %s989, 128, 128, 8
        $region44: #{_lambda_.1} parent=39 // pred_fallthru
          _
      $region40: #{_lambda_.1} parent=5 // pred_fallthru
        _
      %p1011 = scmp.le.s32.totalorder 2, %s14
      // Predicated region
      $region45: #{_lambda_.1} parent=5 // pred_check
        %p1012 = pneg %p1011
      $region46: #{_lambda_.1} parent=5 // pred_check_branch
        %1014 = sbr.rel (%p1012) target = $region48
      $region47: #{_lambda_.1} parent=5 // pred_region
        %s1015 = ssub.s32 %s14, 2
        // Predicated region
        $region49: #{_lambda_.1} parent=47 // pred_check
          %p1016 = pneg %p180
        $region50: #{_lambda_.1} parent=47 // pred_check_branch
          %1018 = sbr.rel (%p1016) target = $region52
        $region51: #{_lambda_.1} parent=47 // pred_region
          %s1019 = sand.u32 %s165, 1
          %s1020 = scalar_lea.sflag [#allocation3], %s1019
          %s1021 = sand.u32 %s165, 1
          %s1022 = smul.addr %s1021, 64
          %s1023 = scalar_lea.vmem [#allocation2], %s1022
          %1024 = dma.done %s1020, 1024
        $region52: #{_lambda_.1} parent=47 // pred_fallthru
          _
      $region48: #{_lambda_.1} parent=5 // pred_fallthru
        _
    $region6: #{_lambda_.1} parent=1 // loop_footer
      %s18 = sadd.s32 1, %s14
    $region7: #{_lambda_.1} parent=1 // loop_footer_branch
      %13 = sbr.rel target = $region3
    $region8: #{_lambda_.1} parent=1 // loop_exit
      _
    %1025 = vsyncpa [#allocation3], 1
    %s1026 = scalar_lea.sflag [#allocation3], 1
    %1027 = vsyncpa %s1026, 1

</llo_original>
